<compile_context>
chip_gen: v7x
topology: tpu7x:2x2x1
jax: 0.10.0
libtpu: 0.0.40
codegen_flags: <defaults>
</compile_context>

<pallas_src>
import math
import functools

import jax
import jax.numpy as jnp
from jax.experimental import pallas as pl
from jax.experimental.pallas import tpu as pltpu


# ---------------------------------------------------------------------------
# Path / block-size selection
# ---------------------------------------------------------------------------

_FAST_PATH_MAX_VOCAB = 2048                   # one-hot-matmul path limit
_FAST_PATH_TABLE_BUDGET = 8 * 1024 * 1024     # resident-table VMEM budget
_FAST_PATH_MAX_TPB = 512
_DMA_PATH_MAX_TPB = 128                       # row DMAs in flight per slot
_VMEM_LIMIT_BYTES = 32 * 1024 * 1024          # explicit (v5e default is 16MiB)


def _sublane_multiple(dtype):
    itemsize = jnp.dtype(dtype).itemsize
    return {4: 8, 2: 16, 1: 32}[itemsize]


def _pick_tokens_per_block(num_tokens, sublane, cap):
    """Largest multiple of `sublane` <= cap dividing num_tokens, else pad."""
    cap = max(sublane, (cap // sublane) * sublane)
    best = None
    t = sublane
    while t <= min(cap, num_tokens):
        if num_tokens % t == 0:
            best = t
        t += sublane
    if best is not None:
        return best, False
    tpb = min(cap, max(sublane, pl.next_power_of_2(num_tokens)))
    tpb = max(sublane, (tpb // sublane) * sublane)
    return tpb, True


# ---------------------------------------------------------------------------
# Kernels
# ---------------------------------------------------------------------------

def _embedding_onehot_kernel(scale, ids_ref, table_ref, out_ref):
    """out_block = one_hot(ids_block, vocab) @ table * scale  (MXU).

    ids_ref   : (tpb, 1) int32 block (VMEM)
    table_ref : (vocab, d_model) -- constant index_map => resident in VMEM
    out_ref   : (tpb, d_model) output block (VMEM)
    """
    tpb = out_ref.shape[0]
    vocab = table_ref.shape[0]
    cols = jax.lax.broadcasted_iota(jnp.int32, (tpb, vocab), 1)
    one_hot = (ids_ref[...] == cols).astype(table_ref.dtype)   # (tpb, vocab)
    acc = jnp.dot(one_hot, table_ref[...], preferred_element_type=jnp.float32)
    out_ref[...] = (acc * scale).astype(out_ref.dtype)


def _embedding_dma_kernel(scale, tpb, ids_ref, table_hbm, out_ref,
                          rows_vmem, sems):
    """Row gather from an HBM table, double-buffered across grid steps.

    ids_ref   : (padded_tokens,) int32, scalar-prefetched into SMEM
    table_hbm : (vocab, d_model), memory_space=pl.ANY (stays in HBM)
    out_ref   : (tpb, d_model) output block (VMEM)
    rows_vmem : (2, tpb, d_model) VMEM gather scratch (two slots)
    sems      : (2,) shared DMA semaphores, one per slot
    """
    i = pl.program_id(0)
    n = pl.num_programs(0)

    def issue_block(blk, slot):
        base = blk * tpb

        @pl.loop(0, tpb)
        def _(t):
            row = ids_ref[base + t]
            pltpu.make_async_copy(
                table_hbm.at[pl.ds(row, 1), :],
                rows_vmem.at[slot, pl.ds(t, 1), :],
                sems.at[slot],
            ).start()

    def wait_block(slot):
        # Every row copy has the same size, so tpb sequential waits on the
        # shared slot semaphore are correct regardless of completion order.
        @pl.loop(0, tpb)
        def _(t):
            pltpu.make_async_copy(
                table_hbm.at[pl.ds(0, 1), :],
                rows_vmem.at[slot, pl.ds(0, 1), :],
                sems.at[slot],
            ).wait()

    # Prime the pipeline on the first grid step (grid axis is "arbitrary",
    # i.e. sequential, so i == 0 always runs first).
    @pl.when(i == 0)
    def _():
        issue_block(0, 0)

    # Prefetch the next block's rows into the other slot BEFORE waiting, so
    # their HBM latency overlaps this block's scale/store and the output
    # writeback DMA.  All SMEM id reads happen before any .wait().
    @pl.when(i + 1 < n)
    def _():
        issue_block(i + 1, (i + 1) % 2)

    slot = i % 2
    wait_block(slot)
    # Padded-tail ids (last block only, when padding happened) are 0: a valid
    # row, sliced off by the wrapper; the wasted bandwidth is < one block.
    out_ref[...] = (rows_vmem[slot] * scale).astype(out_ref.dtype)


# ---------------------------------------------------------------------------
# Wrapper
# ---------------------------------------------------------------------------

def embeddings_forward(ids, table, d_model=None, *, force_path=None):
    """ids: (batch, seq) int, table: (vocab, d_model) -> (batch, seq, d_model)."""
    batch, seq = ids.shape
    vocab, dm = table.shape
    if d_model is None:
        d_model = dm
    assert dm == d_model

    dtype = table.dtype
    itemsize = jnp.dtype(dtype).itemsize
    sublane = _sublane_multiple(dtype)
    scale = math.sqrt(d_model)

    num_tokens = batch * seq
    flat_ids = ids.reshape(num_tokens).astype(jnp.int32)

    table_bytes = vocab * dm * itemsize
    use_onehot = (vocab <= _FAST_PATH_MAX_VOCAB
                  and table_bytes <= _FAST_PATH_TABLE_BUDGET)
    if force_path == "onehot":
        use_onehot = True
    elif force_path == "dma":
        use_onehot = False

    cap = _FAST_PATH_MAX_TPB if use_onehot else _DMA_PATH_MAX_TPB
    # Keep one output block <= ~2 MiB.
    cap = min(cap, max(sublane, (2 * 1024 * 1024) // (dm * itemsize)))
    if use_onehot:
        # Keep the one-hot intermediate <= ~2 MiB as well.
        cap = min(cap, max(sublane, (2 * 1024 * 1024) // (vocab * 4)))
    tpb, _ = _pick_tokens_per_block(num_tokens, sublane, cap)

    padded = pl.cdiv(num_tokens, tpb) * tpb
    if padded != num_tokens:
        # Pad with id 0 (always a valid row); padded rows are sliced off below.
        flat_ids = jnp.pad(flat_ids, (0, padded - num_tokens))
    num_blocks = padded // tpb

    cparams = pltpu.CompilerParams(
        dimension_semantics=("parallel",) if use_onehot else ("arbitrary",),
        vmem_limit_bytes=_VMEM_LIMIT_BYTES,
    )

    if use_onehot:
        ids_2d = flat_ids.reshape(padded, 1)
        out_flat = pl.pallas_call(
            functools.partial(_embedding_onehot_kernel, scale),
            out_shape=jax.ShapeDtypeStruct((padded, dm), dtype),
            grid=(num_blocks,),
            in_specs=[
                pl.BlockSpec((tpb, 1), lambda i: (i, 0)),
                # Constant index_map => DMA'd to VMEM once, resident all grid.
                pl.BlockSpec((vocab, dm), lambda i: (0, 0)),
            ],
            out_specs=pl.BlockSpec((tpb, dm), lambda i: (i, 0)),
            compiler_params=cparams,
        )(ids_2d, table)
    else:
        kernel = functools.partial(_embedding_dma_kernel, scale, tpb)
        out_flat = pl.pallas_call(
            kernel,
            out_shape=jax.ShapeDtypeStruct((padded, dm), dtype),
            grid_spec=pltpu.PrefetchScalarGridSpec(
                num_scalar_prefetch=1,                 # flat_ids -> SMEM
                grid=(num_blocks,),
                in_specs=[
                    pl.BlockSpec(memory_space=pl.ANY),  # table stays in HBM
                ],
                out_specs=pl.BlockSpec((tpb, dm), lambda i, ids: (i, 0)),
                scratch_shapes=[
                    pltpu.VMEM((2, tpb, dm), dtype),     # double-buffered rows
                    pltpu.SemaphoreType.DMA((2,)),       # one shared sem/slot
                ],
            ),
            compiler_params=cparams,
        )(flat_ids, table)

    if padded != num_tokens:
        out_flat = out_flat[:num_tokens]
    return out_flat.reshape(batch, seq, dm)


# ---------------------------------------------------------------------------
# Demo / correctness check
# ---------------------------------------------------------------------------

if __name__ == "__main__":
    key = jax.random.PRNGKey(0)
    k_table, k_ids, k_table2, k_ids2 = jax.random.split(key, 4)

    # --- Fast path: small vocab, resident-table one-hot matmul -------------
    d_model, vocab = 128, 64
    batch, seq = 2, 8
    table = jax.random.normal(k_table, (vocab, d_model), dtype=jnp.float32)
    ids = jax.random.randint(k_ids, (batch, seq), 0, vocab, dtype=jnp.int32)

    out = jax.block_until_ready(embeddings_forward(ids, table, d_model))
    ref = (jnp.take(table, ids.reshape(-1), axis=0)
           .reshape(batch, seq, d_model) * math.sqrt(d_model))
    assert out.shape == (batch, seq, d_model)
    assert out.dtype == jnp.float32
    assert jnp.allclose(out, ref, atol=1e-5, rtol=1e-5)

    # --- HBM gather path: larger vocab, double-buffered row DMAs -----------
    d_model2, vocab2 = 128, 4096
    batch2, seq2 = 2, 128                       # 256 tokens -> 2 blocks of 128
    table2 = jax.random.normal(k_table2, (vocab2, d_model2), dtype=jnp.float32)
    ids2 = jax.random.randint(k_ids2, (batch2, seq2), 0, vocab2,
                              dtype=jnp.int32)

    out2 = jax.block_until_ready(
        embeddings_forward(ids2, table2, d_model2, force_path="dma"))
    ref2 = (jnp.take(table2, ids2.reshape(-1), axis=0)
            .reshape(batch2, seq2, d_model2) * math.sqrt(d_model2))
    assert out2.shape == (batch2, seq2, d_model2)
    assert jnp.allclose(out2, ref2, atol=1e-5, rtol=1e-5)

    print("KERNEL_OK")
</pallas_src>

<mosaic_0001>
module attributes {stable_mosaic.version = 11 : i64} {
  func.func @_embedding_onehot_kernel(%arg0: i32, %arg1: memref<16x1xi32, #tpu.memory_space<vmem>>, %arg2: memref<64x128xf32, #tpu.memory_space<vmem>>, %arg3: memref<16x128xf32, #tpu.memory_space<vmem>>) attributes {dimension_semantics = [#tpu.dimension_semantics<parallel>], iteration_bounds = array<i64: 1>, scalar_prefetch = 0 : i64, scratch_operands = 0 : i64, tpu.core_type = #tpu.core_type<tc>, window_params = [{transform_indices = @transform_0, window_bounds = array<i64: 16, 1>}, {pipeline_mode = #tpu.pipeline_mode<synchronous>, transform_indices = @transform_1, window_bounds = array<i64: 64, 128>}, {transform_indices = @transform_2, window_bounds = array<i64: 16, 128>}]} {
    %0 = tpu.iota {dimensions = array<i32: 1>} : vector<16x64xi32>
    %c0 = arith.constant 0 : index
    %c0_0 = arith.constant 0 : index
    %1 = vector.load %arg1[%c0, %c0_0] : memref<16x1xi32, #tpu.memory_space<vmem>>, vector<16x1xi32>
    %2 = vector.broadcast %1 : vector<16x1xi32> to vector<16x64xi32>
    %3 = arith.cmpi eq, %2, %0 : vector<16x64xi32>
    %4 = arith.extui %3 : vector<16x64xi1> to vector<16x64xi32>
    %5 = arith.sitofp %4 : vector<16x64xi32> to vector<16x64xf32>
    %c0_1 = arith.constant 0 : index
    %c0_2 = arith.constant 0 : index
    %6 = vector.load %arg2[%c0_1, %c0_2] : memref<64x128xf32, #tpu.memory_space<vmem>>, vector<64x128xf32>
    %cst = arith.constant dense<0.000000e+00> : vector<16x128xf32>
    %7 = tpu.matmul %5, %6, %cst {dimension_numbers = #tpu.dot_dimension_numbers<[1], [0], [0], [1], [0, 0, 1, 1], [], []>} : vector<16x64xf32>, vector<64x128xf32>, vector<16x128xf32> -> vector<16x128xf32>
    %cst_3 = arith.constant 11.3137083 : f32
    %8 = vector.broadcast %cst_3 : f32 to vector<16x128xf32>
    %9 = arith.mulf %7, %8 : vector<16x128xf32>
    %c0_4 = arith.constant 0 : index
    %c0_5 = arith.constant 0 : index
    %10 = vector.load %arg3[%c0_4, %c0_5] : memref<16x128xf32, #tpu.memory_space<vmem>>, vector<16x128xf32>
    tpu.vector_store %arg3[%c0_4, %c0_5], %9 {strides = array<i32>} : memref<16x128xf32, #tpu.memory_space<vmem>>, vector<16x128xf32>,
    return
  }
  func.func @transform_0(%arg0: i32) -> (i32, i32) {
    %c0_i32 = arith.constant 0 : i32
    %c0_i32_0 = arith.constant 0 : i32
    return %arg0, %c0_i32 : i32, i32
  }
  func.func @transform_1(%arg0: i32) -> (i32, i32) {
    %c0_i32 = arith.constant 0 : i32
    %c0_i32_0 = arith.constant 0 : i32
    %c0_i32_1 = arith.constant 0 : i32
    return %c0_i32, %c0_i32_0 : i32, i32
  }
  func.func @transform_2(%arg0: i32) -> (i32, i32) {
    %c0_i32 = arith.constant 0 : i32
    %c0_i32_0 = arith.constant 0 : i32
    return %arg0, %c0_i32 : i32, i32
  }
}

</mosaic_0001>

<llo_original>
// kernel: tpu_custom_call.1
$region0: #{tpu_custom_call.1}
  #allocation0 [shape = 'u32[]', space=smem, size = 0x4, offset = 0x4, fixed_abs, tag = 'smem constant byte address 0x4 - core index']
  #allocation1 [shape = 'u32[144,128]{1,0:T(1,128)}', space=vmem, size = 0x12000, scoped, tag = 'internal scratch']
  %s0 = inlined_call_operand.vmem [shape: s32[16,1], index: 0, kind: input, shape index: {}]
  %s1 = inlined_call_operand.hbm [shape: f32[64,128], index: 1, kind: input, shape index: {}]
  %s2 = inlined_call_operand.hbm [shape: f32[16,128], index: 2, kind: output, shape index: {}]
  %s3 = sld [smem:[#allocation0]]
  $region22: #{tpu_custom_call.1} parent=0
    _
  %s5 = ssub.s32 1, %s3
  %s6 = scalar_select 0, %s5, %s3
  $region1: #{tpu_custom_call.1} parent=0
    #allocation2 [shape = 'u8[32768]{0}', space=vmem, size = 0x8000, scoped, tag = 'input window, operand 1, single buffered']
    #allocation3 [shape = 's32[1]{0}', space=sflag, size = 0x4, scoped, tag = 'scoped memory for tpu_custom_call.1']
    #allocation4 [shape = 's32[1]{0}', space=sflag, size = 0x4, scoped, tag = 'scoped memory for tpu_custom_call.1']
    #allocation5 [shape = 'u8[8192]{0}', space=vmem, size = 0x2000, scoped, tag = 'output window, operand 0, single buffered']
    %7 = vsyncpa [#allocation3], 0
    %8 = vsyncpa [#allocation4], 0
    // Predicated region
    $region2: #{tpu_custom_call.1} parent=1 // pred_check
      _
    $region3: #{tpu_custom_call.1} parent=1 // pred_check_branch
      %10 = sbr.rel (0) target = $region5
    $region4: #{tpu_custom_call.1} parent=1 // pred_region
      _
    $region5: #{tpu_custom_call.1} parent=1 // pred_fallthru
      _
    // Predicated region
    $region6: #{tpu_custom_call.1} parent=1 // pred_check
      _
    $region7: #{tpu_custom_call.1} parent=1 // pred_check_branch
      %12 = sbr.rel (0) target = $region9
    $region8: #{tpu_custom_call.1} parent=1 // pred_region
      %s14 = ssub.s32 1024, 1024
      %15 = vsyncadd [#allocation3], %s14
      %s16 = sshll.u32 [#allocation2], 4
      %s17 = int_to_ptr.vmem [resolvable:$true] %s16
      %22 = dma.hbm_to_vmem [thread:$0]  %s1, 1024, %s17, [#allocation3], 128, 128, 8
    $region9: #{tpu_custom_call.1} parent=1 // pred_fallthru
      _
    // Predicated region
    $region10: #{tpu_custom_call.1} parent=1 // pred_check
      _
    $region11: #{tpu_custom_call.1} parent=1 // pred_check_branch
      %24 = sbr.rel (0) target = $region13
    $region12: #{tpu_custom_call.1} parent=1 // pred_region
      %25 = dma.done [#allocation3], 1024
    $region13: #{tpu_custom_call.1} parent=1 // pred_fallthru
      _
    %v26 = vlaneseq
    %v27 = vand.u32 %v26, 127
    %v28 = vld [vmem:[%s0] sm:$0xff]
    %v29 = vld [vmem:[%s0 + $0x8] sm:$0xff]
    %30 = vset.pattern.permute.xlu0 0
    %31 = vperm.xlu0 %30, %v28
    %v32 = vpop.permute.xlu0 %31
    %33 = vset.pattern.permute.xlu0 0
    %34 = vperm.xlu0 %33, %v29
    %v35 = vpop.permute.xlu0 %34
    %vm36 = vcmp.eq.s32.totalorder %v32, %v27
    %vm37 = vcmp.eq.s32.totalorder %v35, %v27
    %v38 = vsel %vm36, 1, 0
    %v39 = vsel %vm37, 1, 0
    %v40 = vcvt.s32.f32 %v38
    %v41 = vcvt.s32.f32 %v39
    %v42 = vld [vmem:[#allocation2] sm:$0xff]
    %v43 = vld [vmem:[#allocation2 + $0x8] sm:$0xff]
    %v44 = vld [vmem:[#allocation2 + $0x10] sm:$0xff]
    %v45 = vld [vmem:[#allocation2 + $0x18] sm:$0xff]
    %v46 = vld [vmem:[#allocation2 + $0x20] sm:$0xff]
    %v47 = vld [vmem:[#allocation2 + $0x28] sm:$0xff]
    %v48 = vld [vmem:[#allocation2 + $0x30] sm:$0xff]
    %v49 = vld [vmem:[#allocation2 + $0x38] sm:$0xff]
    %vm50 = vcmask 523264
    %v52 = vsel %vm50, %v40, 0
    %v55 = vsel %vm50, %v41, 0
    %57 = vmatprep.subr.mxu0 0.0
    %58 = vmatpush1.msra.mxu0 %v42
    %59 = vmatprep.subr.mxu0 0.0
    %60 = vmatpush1.msra.mxu0 %v43
    %61 = vmatprep.subr.mxu0 0.0
    %62 = vmatpush1.msra.mxu0 %v44
    %63 = vmatprep.subr.mxu0 0.0
    %64 = vmatpush1.msra.mxu0 %v45
    %65 = vmatprep.subr.mxu0 0.0
    %66 = vmatpush1.msra.mxu0 %v46
    %67 = vmatprep.subr.mxu0 0.0
    %68 = vmatpush1.msra.mxu0 %v47
    %69 = vmatprep.subr.mxu0 0.0
    %70 = vmatpush1.msra.mxu0 %v48
    %71 = vmatprep.subr.mxu0 0.0
    %72 = vmatpush1.msra.mxu0 %v49
    %73 = vmatprep.subr.mxu0 0.0
    %74 = vmatpush1.msra.mxu0 0.0
    %75 = vmatprep.subr.mxu0 0.0
    %76 = vmatpush1.msra.mxu0 0.0
    %77 = vmatprep.subr.mxu0 0.0
    %78 = vmatpush1.msra.mxu0 0.0
    %79 = vmatprep.subr.mxu0 0.0
    %80 = vmatpush1.msra.mxu0 0.0
    %81 = vmatprep.subr.mxu0 0.0
    %82 = vmatpush1.msra.mxu0 0.0
    %83 = vmatprep.subr.mxu0 0.0
    %84 = vmatpush1.msra.mxu0 0.0
    %85 = vmatprep.subr.mxu0 0.0
    %86 = vmatpush1.msra.mxu0 0.0
    %87 = vmatprep.subr.mxu0 0.0
    %88 = vmatpush1.msra.mxu0 0.0
    %89 = vmatprep.subr.mxu0 0.0
    %90 = vmatpush1.msra.mxu0 0.0
    %91 = vmatprep.subr.mxu0 0.0
    %92 = vmatpush1.msra.mxu0 0.0
    %93 = vmatprep.subr.mxu0 0.0
    %94 = vmatpush1.msra.mxu0 0.0
    %95 = vmatprep.subr.mxu0 0.0
    %96 = vmatpush1.msra.mxu0 0.0
    %97 = vmatprep.subr.mxu0 0.0
    %98 = vmatpush1.msra.mxu0 0.0
    %99 = vmatprep.subr.mxu0 0.0
    %100 = vmatpush1.msra.mxu0 0.0
    %101 = vmatprep.subr.mxu0 0.0
    %102 = vmatpush1.msra.mxu0 0.0
    %103 = vmatprep.subr.mxu0 0.0
    %104 = vmatpush1.msra.mxu0 0.0
    %105 = vmatprep.subr.mxu0 0.0
    %106 = vmatpush1.msra.mxu0 0.0
    %107 = vmatprep.subr.mxu0 0.0
    %108 = vmatpush1.msra.mxu0 0.0
    %109 = vmatprep.subr.mxu0 0.0
    %110 = vmatpush1.msra.mxu0 0.0
    %111 = vmatprep.subr.mxu0 0.0
    %112 = vmatpush1.msra.mxu0 0.0
    %113 = vmatprep.subr.mxu0 0.0
    %114 = vmatpush1.msra.mxu0 0.0
    %115 = vmatprep.subr.mxu0 0.0
    %116 = vmatpush1.msra.mxu0 0.0
    %117 = vmatprep.subr.mxu0 0.0
    %118 = vmatpush1.msra.mxu0 0.0
    %119 = vmatprep.subr.mxu0 0.0
    %120 = vmatpush1.msra.mxu0 0.0
    %121 = vmatprep.mubr.f32.mxu0 0.0
    %122 = vmatmul.mubr.f32.gmra.mrb[0].mxu0 %v52
    %v123 = vpop.f32.mrb[0].mxu0
    %v124 = vadd.f32 0.0, %v123
    %v125 = vpop.f32.mrb[0].mxu0
    %126 = vmatprep.mubr.f32.mxu0 0.0
    %127 = vmatmul.mubr.f32.gmra.mrb[0].mxu0 %v55
    %v128 = vpop.f32.mrb[0].mxu0
    %v129 = vadd.f32 0.0, %v128
    %v130 = vpop.f32.mrb[0].mxu0
    %131 = vdwg.mxu0
    %v132 = vmul.f32 %v124, 11.313708
    %v133 = vmul.f32 %v129, 11.313708
    %134 = vst [vmem:[#allocation5] sm:$0xff] %v132
    %135 = vst [vmem:[#allocation5 + $0x8] sm:$0xff] %v133
    // Predicated region
    $region14: #{tpu_custom_call.1} parent=1 // pred_check
      _
    $region15: #{tpu_custom_call.1} parent=1 // pred_check_branch
      %137 = sbr.rel (0) target = $region17
    $region16: #{tpu_custom_call.1} parent=1 // pred_region
      %s139 = ssub.s32 256, 256
      %140 = vsyncadd [#allocation4], %s139
      %s141 = sshll.u32 [#allocation5], 4
      %s142 = int_to_ptr.vmem [resolvable:$true] %s141
      %147 = dma.vmem_to_hbm [thread:$0]  %s142, 256, %s2, [#allocation4], 128, 128, 8
    $region17: #{tpu_custom_call.1} parent=1 // pred_fallthru
      _
    // Predicated region
    $region18: #{tpu_custom_call.1} parent=1 // pred_check
      _
    $region19: #{tpu_custom_call.1} parent=1 // pred_check_branch
      %149 = sbr.rel (0) target = $region21
    $region20: #{tpu_custom_call.1} parent=1 // pred_region
      %150 = dma.done [#allocation4], 256
    $region21: #{tpu_custom_call.1} parent=1 // pred_fallthru
      _
    %151 = vsyncpa [#allocation3], 1
    %152 = vsyncpa [#allocation4], 1

</llo_original>
